<compile_context>
chip_gen: v5e
topology: v5e:2x2
jax: 0.10.0
libtpu: 0.0.40
codegen_flags: <defaults>
</compile_context>

<pallas_src>
import functools

import jax
import jax.numpy as jnp
from jax.experimental import pallas as pl
from jax.experimental.pallas import tpu as pltpu


def _nll_mls_kernel(x_ref, t_ref, out_ref, *, confidence, smoothing,
                    num_classes, tile_n, n_total, mask_rows):
    """One row tile: fused log_softmax + weighted reductions -> partial sum."""
    i = pl.program_id(0)

    # Upcasts are folded into their consumers; `shifted` is the only full-tile
    # f32 temporary kept live (lets tile_n grow under the same VMEM budget).
    x = x_ref[...]                                               # native dtype
    m = jnp.max(x, axis=-1, keepdims=True).astype(jnp.float32)   # (tile_n, 1)
    shifted = x.astype(jnp.float32) - m                          # (tile_n, C)
    lse = jnp.log(jnp.sum(jnp.exp(shifted), axis=-1, keepdims=True))

    t = t_ref[...]
    sum_t = jnp.sum(t.astype(jnp.float32), axis=-1, keepdims=True)
    sum_st = jnp.sum(shifted * t.astype(jnp.float32), axis=-1, keepdims=True)
    sum_s = jnp.sum(shifted, axis=-1, keepdims=True)

    # logprobs = shifted - lse
    #   nll    = lse*sum(t) - sum(shifted*t)
    #   smooth = lse - sum(shifted)/C
    loss_row = (confidence * (lse * sum_t - sum_st)
                + (smoothing / num_classes) * (num_classes * lse - sum_s))

    if mask_rows:
        # Ragged final block: drop garbage rows past the true batch size
        # (select, not multiply, so inf/NaN in garbage rows cannot leak).
        row_ids = (jax.lax.broadcasted_iota(jnp.int32, (tile_n, 1), 0)
                   + i * tile_n)
        loss_row = jnp.where(row_ids < n_total, loss_row, 0.0)

    tile_sum = jnp.sum(loss_row)                                 # scalar partial
    # Lane/sublane-dense unmasked store; epilogue divides by the 8*128 factor.
    out_ref[...] = jnp.broadcast_to(tile_sum, (1, 8, 128))


def _round_up(a, b):
    return (a + b - 1) // b * b


def nll_multilabel_smooth(x, target, *, smoothing=0.0, max_tile_n=None):
    """Pallas implementation of NLLMultiLabelSmooth.forward (training mode)."""
    assert x.shape == target.shape and x.ndim == 2
    n, c = x.shape
    confidence = 1.0 - smoothing

    # ---- Generation-aware VMEM budgeting -----------------------------------
    try:
        vmem_cap = int(pltpu.get_tpu_info().vmem_capacity_bytes)
    except Exception:
        vmem_cap = 64 * 1024 * 1024                 # conservative fallback
    if vmem_cap >= 96 * 1024 * 1024:                # v5e / v6e: 128 MiB VMEM
        input_vmem_budget = 72 * 1024 * 1024
        vmem_limit = 100 * 1024 * 1024
        default_max_tile = 8192
        deep_buffering_ok = True
    else:                                           # v7x: 64 MiB VMEM per TC
        input_vmem_budget = 22 * 1024 * 1024
        vmem_limit = 38 * 1024 * 1024
        default_max_tile = 4096
        deep_buffering_ok = False
    if max_tile_n is None:
        max_tile_n = default_max_tile

    # Per-row VMEM footprint: double-buffered x & target DMA blocks plus ~2
    # live f32 temporaries (casts are fused inside the kernel).
    bytes_per_row = c * (2 * x.dtype.itemsize + 2 * target.dtype.itemsize + 2 * 4)
    tile_n = input_vmem_budget // bytes_per_row
    # Keep at least 2 tiles so the "parallel" axis can feed both v7x TCs.
    tile_n = min(tile_n, max_tile_n, _round_up(pl.cdiv(n, 2), 8))
    tile_n = max(8, tile_n // 8 * 8)

    est_vmem = bytes_per_row * tile_n
    assert est_vmem <= vmem_limit, (
        f"C={c} is too large for a single full-C row tile on this TPU "
        f"(~{est_vmem >> 20} MiB VMEM needed, limit {vmem_limit >> 20} MiB); "
        f"a class-chunk (online-LSE) axis is required.")

    num_tiles = pl.cdiv(n, tile_n)          # ragged final block, no jnp.pad copy
    mask_rows = (n % tile_n != 0)

    kernel = functools.partial(
        _nll_mls_kernel,
        confidence=confidence,
        smoothing=smoothing,
        num_classes=c,
        tile_n=tile_n,
        n_total=n,
        mask_rows=mask_rows,
    )

    # Deeper input buffering only where VMEM is plentiful (v5e/v6e), blocks
    # are small, and there are enough grid steps to benefit.
    block_bytes = tile_n * c * max(x.dtype.itemsize, target.dtype.itemsize)
    spec_kwargs = {}
    if deep_buffering_ok and num_tiles >= 4 and block_bytes < (1 << 20):
        spec_kwargs["pipeline_mode"] = pl.Buffered(3)

    in_specs = [
        pl.BlockSpec((tile_n, c), lambda i: (i, 0), **spec_kwargs),
        pl.BlockSpec((tile_n, c), lambda i: (i, 0), **spec_kwargs),
    ]

    partials = pl.pallas_call(
        kernel,
        out_shape=jax.ShapeDtypeStruct((num_tiles, 8, 128), jnp.float32),
        grid_spec=pltpu.PrefetchScalarGridSpec(
            num_scalar_prefetch=0,
            grid=(num_tiles,),
            in_specs=in_specs,
            out_specs=pl.BlockSpec((1, 8, 128), lambda i: (i, 0, 0)),
        ),
        compiler_params=pltpu.CompilerParams(
            dimension_semantics=("parallel",),      # no carried accumulator
            vmem_limit_bytes=vmem_limit),
    )(x, target)

    # Tiny epilogue: each tile's partial sum is replicated over 8*128 slots,
    # so a plain dense sum (no strided gather) divided by the factor and N.
    return jnp.sum(partials) / jnp.float32(n * 8 * 128)


def _reference(x, target, smoothing):
    x = x.astype(jnp.float32)
    t = target.astype(jnp.float32)
    logprobs = jax.nn.log_softmax(x, axis=-1)
    nll = -(logprobs * t).sum(-1)
    smooth = -logprobs.mean(-1)
    return ((1.0 - smoothing) * nll + smoothing * smooth).mean()


def _mixup_targets(k_cls, k_perm, k_lam, n, c, dtype):
    cls_a = jax.random.randint(k_cls, (n,), 0, c)
    cls_b = cls_a[jax.random.permutation(k_perm, n)]
    lam = jax.random.uniform(k_lam, (n, 1), dtype=jnp.float32)
    t = (lam * jax.nn.one_hot(cls_a, c, dtype=jnp.float32)
         + (1.0 - lam) * jax.nn.one_hot(cls_b, c, dtype=jnp.float32))
    return t.astype(dtype)


if __name__ == "__main__":
    key = jax.random.PRNGKey(0)
    k_x, k_t, k_lam, k_perm, k_x2, k_t2, k_lam2, k_perm2 = jax.random.split(key, 8)

    smoothing = 0.1

    # --- f32 check, batch NOT a multiple of the row tile (exercises mask) ---
    N, C = 12, 40
    x = jax.random.normal(k_x, (N, C), dtype=jnp.float32)
    target = _mixup_targets(k_t, k_perm, k_lam, N, C, jnp.float32)

    loss = jax.block_until_ready(
        nll_multilabel_smooth(x, target, smoothing=smoothing))
    ref = _reference(x, target, smoothing)
    assert jnp.allclose(loss, ref, atol=1e-4, rtol=1e-4), (loss, ref)

    # --- bf16 inputs (halves HBM traffic; compute stays f32 in-kernel) ------
    N2, C2 = 16, 32
    x2 = jax.random.normal(k_x2, (N2, C2), dtype=jnp.float32).astype(jnp.bfloat16)
    target2 = _mixup_targets(k_t2, k_perm2, k_lam2, N2, C2, jnp.bfloat16)

    loss2 = jax.block_until_ready(
        nll_multilabel_smooth(x2, target2, smoothing=smoothing))
    ref2 = _reference(x2, target2, smoothing)
    assert jnp.allclose(loss2, ref2, atol=1e-4, rtol=1e-4), (loss2, ref2)

    print("KERNEL_OK")
</pallas_src>

<mosaic_0001>
module attributes {stable_mosaic.version = 11 : i64} {
  func.func @_nll_mls_kernel(%arg0: i32, %arg1: memref<8x40xf32, #tpu.memory_space<vmem>>, %arg2: memref<8x40xf32, #tpu.memory_space<vmem>>, %arg3: memref<1x8x128xf32, #tpu.memory_space<vmem>>) attributes {dimension_semantics = [#tpu.dimension_semantics<parallel>], iteration_bounds = array<i64: 2>, scalar_prefetch = 0 : i64, scratch_operands = 0 : i64, tpu.core_type = #tpu.core_type<tc>, window_params = [{transform_indices = @transform_0, window_bounds = array<i64: 8, 40>}, {transform_indices = @transform_1, window_bounds = array<i64: 8, 40>}, {transform_indices = @transform_2, window_bounds = array<i64: 1, 8, 128>}]} {
    %c0 = arith.constant 0 : index
    %c0_0 = arith.constant 0 : index
    %0 = vector.load %arg1[%c0, %c0_0] : memref<8x40xf32, #tpu.memory_space<vmem>>, vector<8x40xf32>
    %cst = arith.constant dense<0xFF800000> : vector<8xf32>
    %1 = vector.multi_reduction <maximumf>, %0, %cst [1] : vector<8x40xf32> to vector<8xf32>
    %2 = vector.shape_cast %1 : vector<8xf32> to vector<8x1xf32>
    %3 = vector.broadcast %2 : vector<8x1xf32> to vector<8x40xf32>
    %4 = arith.subf %0, %3 : vector<8x40xf32>
    %5 = math.exp %4 : vector<8x40xf32>
    %cst_1 = arith.constant dense<0.000000e+00> : vector<8xf32>
    %6 = vector.multi_reduction <add>, %5, %cst_1 [1] : vector<8x40xf32> to vector<8xf32>
    %7 = vector.shape_cast %6 : vector<8xf32> to vector<8x1xf32>
    %8 = math.log %7 : vector<8x1xf32>
    %c0_2 = arith.constant 0 : index
    %c0_3 = arith.constant 0 : index
    %9 = vector.load %arg2[%c0_2, %c0_3] : memref<8x40xf32, #tpu.memory_space<vmem>>, vector<8x40xf32>
    %cst_4 = arith.constant dense<0.000000e+00> : vector<8xf32>
    %10 = vector.multi_reduction <add>, %9, %cst_4 [1] : vector<8x40xf32> to vector<8xf32>
    %11 = vector.shape_cast %10 : vector<8xf32> to vector<8x1xf32>
    %12 = arith.mulf %4, %9 : vector<8x40xf32>
    %cst_5 = arith.constant dense<0.000000e+00> : vector<8xf32>
    %13 = vector.multi_reduction <add>, %12, %cst_5 [1] : vector<8x40xf32> to vector<8xf32>
    %14 = vector.shape_cast %13 : vector<8xf32> to vector<8x1xf32>
    %cst_6 = arith.constant dense<0.000000e+00> : vector<8xf32>
    %15 = vector.multi_reduction <add>, %4, %cst_6 [1] : vector<8x40xf32> to vector<8xf32>
    %16 = vector.shape_cast %15 : vector<8xf32> to vector<8x1xf32>
    %17 = arith.mulf %8, %11 : vector<8x1xf32>
    %18 = arith.subf %17, %14 : vector<8x1xf32>
    %cst_7 = arith.constant 0.899999976 : f32
    %19 = vector.broadcast %cst_7 : f32 to vector<8x1xf32>
    %20 = arith.mulf %19, %18 : vector<8x1xf32>
    %cst_8 = arith.constant 4.000000e+01 : f32
    %21 = vector.broadcast %cst_8 : f32 to vector<8x1xf32>
    %22 = arith.mulf %21, %8 : vector<8x1xf32>
    %23 = arith.subf %22, %16 : vector<8x1xf32>
    %cst_9 = arith.constant 2.500000e-03 : f32
    %24 = vector.broadcast %cst_9 : f32 to vector<8x1xf32>
    %25 = arith.mulf %24, %23 : vector<8x1xf32>
    %26 = arith.addf %20, %25 : vector<8x1xf32>
    %27 = tpu.iota {dimensions = array<i32: 0>} : vector<8x1xi32>
    %c8_i32 = arith.constant 8 : i32
    %28 = arith.muli %arg0, %c8_i32 : i32
    %29 = vector.broadcast %28 : i32 to vector<8x1xi32>
    %30 = arith.addi %27, %29 : vector<8x1xi32>
    %c12_i32 = arith.constant 12 : i32
    %31 = vector.broadcast %c12_i32 : i32 to vector<8x1xi32>
    %32 = arith.cmpi slt, %30, %31 : vector<8x1xi32>
    %cst_10 = arith.constant 0.000000e+00 : f32
    %33 = vector.broadcast %cst_10 : f32 to vector<8x1xf32>
    %34 = arith.select %32, %26, %33 : vector<8x1xi1>, vector<8x1xf32>
    %35 = vector.shape_cast %34 : vector<8x1xf32> to vector<1x8x1xf32>
    %cst_11 = arith.constant dense<0.000000e+00> : vector<1xf32>
    %36 = vector.multi_reduction <add>, %35, %cst_11 [1, 2] : vector<1x8x1xf32> to vector<1xf32>
    %37 = vector.shape_cast %36 : vector<1xf32> to vector<1x1x1xf32>
    %38 = vector.extract %37[0, 0, 0] : f32 from vector<1x1x1xf32>
    %39 = vector.broadcast %38 : f32 to vector<1x8x128xf32>
    %c0_12 = arith.constant 0 : index
    %c0_13 = arith.constant 0 : index
    %c0_14 = arith.constant 0 : index
    %40 = vector.load %arg3[%c0_12, %c0_13, %c0_14] : memref<1x8x128xf32, #tpu.memory_space<vmem>>, vector<1x8x128xf32>
    tpu.vector_store %arg3[%c0_12, %c0_13, %c0_14], %39 {strides = array<i32>} : memref<1x8x128xf32, #tpu.memory_space<vmem>>, vector<1x8x128xf32>,
    return
  }
  func.func @transform_0(%arg0: i32) -> (i32, i32) {
    %c0_i32 = arith.constant 0 : i32
    %c0_i32_0 = arith.constant 0 : i32
    return %arg0, %c0_i32 : i32, i32
  }
  func.func @transform_1(%arg0: i32) -> (i32, i32) {
    %c0_i32 = arith.constant 0 : i32
    %c0_i32_0 = arith.constant 0 : i32
    return %arg0, %c0_i32 : i32, i32
  }
  func.func @transform_2(%arg0: i32) -> (i32, i32, i32) {
    %c0_i32 = arith.constant 0 : i32
    %c0_i32_0 = arith.constant 0 : i32
    %c0_i32_1 = arith.constant 0 : i32
    return %arg0, %c0_i32, %c0_i32_0 : i32, i32, i32
  }
}

</mosaic_0001>

<llo_original>
// kernel: tpu_custom_call.1
$region0: #{tpu_custom_call.1}
  #allocation0 [shape = 'u32[]', space=smem, size = 0x4, offset = 0x4, fixed_abs, tag = 'smem constant byte address 0x4 - core index']
  #allocation1 [shape = 'u32[72,128]{1,0:T(1,128)}', space=vmem, size = 0x9000, scoped, tag = 'internal scratch']
  %s0 = inlined_call_operand.hbm [shape: f32[12,40], index: 0, kind: input, shape index: {}]
  %s1 = inlined_call_operand.hbm [shape: f32[12,40], index: 1, kind: input, shape index: {}]
  %s2 = inlined_call_operand.hbm [shape: f32[2,8,128], index: 2, kind: output, shape index: {}]
  %s3 = sld [smem:[#allocation0]]
  $region49: #{tpu_custom_call.1} parent=0
    _
  %s5 = ssub.s32 1, %s3
  %s6 = scalar_select 0, %s5, %s3
  $region1: #{tpu_custom_call.1} parent=0
    #allocation2 [shape = 'u8[8192]{0}', space=vmem, size = 0x2000, scoped, tag = 'input window, operand 0']
    #allocation3 [shape = 's32[2]{0}', space=sflag, size = 0x8, scoped, tag = 'scoped memory for tpu_custom_call.1']
    #allocation4 [shape = 's32[2]{0}', space=sflag, size = 0x8, scoped, tag = 'scoped memory for tpu_custom_call.1']
    #allocation5 [shape = 'u8[8192]{0}', space=vmem, size = 0x2000, scoped, tag = 'input window, operand 1']
    #allocation6 [shape = 's32[2]{0}', space=sflag, size = 0x8, scoped, tag = 'scoped memory for tpu_custom_call.1']
    #allocation7 [shape = 'u8[8192]{0}', space=vmem, size = 0x2000, scoped, tag = 'output window, operand 0']
    %7 = vsyncpa [#allocation3], 0
    %s8 = scalar_lea.sflag [#allocation3], 1
    %9 = vsyncpa %s8, 0
    %10 = vsyncpa [#allocation6], 0
    %s11 = scalar_lea.sflag [#allocation6], 1
    %12 = vsyncpa %s11, 0
    %13 = vsyncpa [#allocation4], 0
    %s14 = scalar_lea.sflag [#allocation4], 1
    %15 = vsyncpa %s14, 0
    loop: start=0, step=1, limit=4
    $region2: #{tpu_custom_call.1} parent=1 // loop_pre_header
      _
    $region3: #{tpu_custom_call.1} parent=1 // loop_header
      %s17 = sphi 0, %s21
      %p18 = scmp.ge.s32.totalorder %s17, 4
      %s27 = sphi 0, %s29
      %s30 = sphi 0, %s27
      %s31 = sphi 0, %s30
      %s47 = sphi 0, %s31
      %s53 = sphi 0, %s55
      %s56 = sphi 0, %s53
      %s57 = sphi 0, %s56
      %s73 = sphi 0, %s57
      %s79 = sphi 0, %s81
      %s82 = sphi 0, %s79
      %s83 = sphi 0, %s82
      %s99 = sphi 0, %s83
    $region4: #{tpu_custom_call.1} parent=1 // loop_header_branch
      %20 = sbr.rel (%p18) target = $region8
    $region5: #{tpu_custom_call.1} parent=1 // loop_body
      %s22 = ssub.s32 %s17, 1
      %s23 = ssub.s32 %s17, 2
      %s24 = sadd.s32 %s17, 1
      %s25 = ssub.s32 %s17, %s24
      %p26 = scmp.eq.s32.totalorder %s25, 0
      %s28 = sadd.s32 %s27, 1
      %s29 = scalar_select %p26, %s27, %s28
      %p32 = pneg %p26
      %p33 = scmp.eq.s32.totalorder %s17, 1
      %p34 = por %p32, %p33
      %p35 = scmp.ne.s32.totalorder %s27, %s30
      %p36 = scmp.eq.s32.totalorder %s17, 0
      %p37 = por %p35, %p36
      %p38 = scmp.ne.s32.totalorder %s27, %s30
      %p39 = scmp.eq.s32.totalorder %s22, 1
      %p40 = por %p38, %p39
      %p41 = scmp.ne.s32.totalorder %s30, %s31
      %p42 = scmp.eq.s32.totalorder %s22, 0
      %p43 = por %p41, %p42
      %p44 = scmp.ne.s32.totalorder %s30, %s31
      %p45 = scmp.eq.s32.totalorder %s23, 1
      %p46 = por %p44, %p45
      %p48 = scmp.ne.s32.totalorder %s31, %s47
      %p49 = scmp.eq.s32.totalorder %s23, 0
      %p50 = por %p48, %p49
      %s51 = ssub.s32 %s17, %s24
      %p52 = scmp.eq.s32.totalorder %s51, 0
      %s54 = sadd.s32 %s53, 1
      %s55 = scalar_select %p52, %s53, %s54
      %p58 = pneg %p52
      %p59 = scmp.eq.s32.totalorder %s17, 1
      %p60 = por %p58, %p59
      %p61 = scmp.ne.s32.totalorder %s53, %s56
      %p62 = scmp.eq.s32.totalorder %s17, 0
      %p63 = por %p61, %p62
      %p64 = scmp.ne.s32.totalorder %s53, %s56
      %p65 = scmp.eq.s32.totalorder %s22, 1
      %p66 = por %p64, %p65
      %p67 = scmp.ne.s32.totalorder %s56, %s57
      %p68 = scmp.eq.s32.totalorder %s22, 0
      %p69 = por %p67, %p68
      %p70 = scmp.ne.s32.totalorder %s56, %s57
      %p71 = scmp.eq.s32.totalorder %s23, 1
      %p72 = por %p70, %p71
      %p74 = scmp.ne.s32.totalorder %s57, %s73
      %p75 = scmp.eq.s32.totalorder %s23, 0
      %p76 = por %p74, %p75
      %s77 = ssub.s32 %s17, %s24
      %p78 = scmp.eq.s32.totalorder %s77, 0
      %s80 = sadd.s32 %s79, 1
      %s81 = scalar_select %p78, %s79, %s80
      %p84 = pneg %p78
      %p85 = scmp.eq.s32.totalorder %s17, 1
      %p86 = por %p84, %p85
      %p87 = scmp.ne.s32.totalorder %s79, %s82
      %p88 = scmp.eq.s32.totalorder %s17, 0
      %p89 = por %p87, %p88
      %p90 = scmp.ne.s32.totalorder %s79, %s82
      %p91 = scmp.eq.s32.totalorder %s22, 1
      %p92 = por %p90, %p91
      %p93 = scmp.ne.s32.totalorder %s82, %s83
      %p94 = scmp.eq.s32.totalorder %s22, 0
      %p95 = por %p93, %p94
      %p96 = scmp.ne.s32.totalorder %s82, %s83
      %p97 = scmp.eq.s32.totalorder %s23, 1
      %p98 = por %p96, %p97
      %p100 = scmp.ne.s32.totalorder %s83, %s99
      %p101 = scmp.eq.s32.totalorder %s23, 0
      %p102 = por %p100, %p101
      %p103 = scmp.le.s32.totalorder 1, %s17
      %p104 = scmp.lt.s32.totalorder %s17, 3
      %p105 = pnand %p103, %p104
      %p106 = pneg %p105
      // Predicated region
      $region9: #{tpu_custom_call.1} parent=5 // pred_check
        _
      $region10: #{tpu_custom_call.1} parent=5 // pred_check_branch
        %108 = sbr.rel (%p105) target = $region12
      $region11: #{tpu_custom_call.1} parent=5 // pred_region
        %s109 = ssub.s32 %s17, 1
      $region12: #{tpu_custom_call.1} parent=5 // pred_fallthru
        _
      %p110 = scmp.lt.s32.totalorder %s17, 2
      // Predicated region
      $region13: #{tpu_custom_call.1} parent=5 // pred_check
        %p111 = pneg %p110
      $region14: #{tpu_custom_call.1} parent=5 // pred_check_branch
        %113 = sbr.rel (%p111) target = $region16
      $region15: #{tpu_custom_call.1} parent=5 // pred_region
        // Predicated region
        $region17: #{tpu_custom_call.1} parent=15 // pred_check
          %p114 = pneg %p37
        $region18: #{tpu_custom_call.1} parent=15 // pred_check_branch
          %116 = sbr.rel (%p114) target = $region20
        $region19: #{tpu_custom_call.1} parent=15 // pred_region
          %s117 = sand.u32 %s27, 1
          %s118 = scalar_lea.sflag [#allocation3], %s117
          %s119 = sand.u32 %s27, 1
          %s120 = smul.addr %s119, 8
          %s121 = scalar_lea.vmem [#allocation2], %s120
          %123 = vsyncadd %s118, 0
          %s124 = smul.addr %s17, 8
          %s125 = scalar_lea.hbm %s0, %s124
          %s127 = sshll.u32 %s125, 4
          %s128 = int_to_ptr.hbm [resolvable:$true] %s127
          %s129 = sshll.u32 %s121, 4
          %s130 = int_to_ptr.vmem [resolvable:$true] %s129
          %132 = dma.hbm_to_vmem [thread:$0]  %s128, 128, %s130, %s118
        $region20: #{tpu_custom_call.1} parent=15 // pred_fallthru
          _
        // Predicated region
        $region21: #{tpu_custom_call.1} parent=15 // pred_check
          %p133 = pneg %p63
        $region22: #{tpu_custom_call.1} parent=15 // pred_check_branch
          %135 = sbr.rel (%p133) target = $region24
        $region23: #{tpu_custom_call.1} parent=15 // pred_region
          %s136 = sand.u32 %s53, 1
          %s137 = scalar_lea.sflag [#allocation6], %s136
          %s138 = sand.u32 %s53, 1
          %s139 = smul.addr %s138, 8
          %s140 = scalar_lea.vmem [#allocation5], %s139
          %142 = vsyncadd %s137, 0
          %s143 = smul.addr %s17, 8
          %s144 = scalar_lea.hbm %s1, %s143
          %s146 = sshll.u32 %s144, 4
          %s147 = int_to_ptr.hbm [resolvable:$true] %s146
          %s148 = sshll.u32 %s140, 4
          %s149 = int_to_ptr.vmem [resolvable:$true] %s148
          %151 = dma.hbm_to_vmem [thread:$0]  %s147, 128, %s149, %s137
        $region24: #{tpu_custom_call.1} parent=15 // pred_fallthru
          _
      $region16: #{tpu_custom_call.1} parent=5 // pred_fallthru
        _
      %p152 = scmp.le.s32.totalorder 1, %s17
      %p153 = scmp.lt.s32.totalorder %s17, 3
      %p154 = pnand %p152, %p153
      %p155 = pneg %p154
      // Predicated region
      $region25: #{tpu_custom_call.1} parent=5 // pred_check
        _
      $region26: #{tpu_custom_call.1} parent=5 // pred_check_branch
        %157 = sbr.rel (%p154) target = $region28
      $region27: #{tpu_custom_call.1} parent=5 // pred_region
        %s158 = ssub.s32 %s17, 1
        %s159 = sand.u32 %s30, 1
        %s160 = scalar_lea.sflag [#allocation3], %s159
        %s161 = sand.u32 %s30, 1
        %s162 = smul.addr %s161, 8
        %s163 = scalar_lea.vmem [#allocation2], %s162
        // Predicated region
        $region29: #{tpu_custom_call.1} parent=27 // pred_check
          %p164 = pneg %p43
        $region30: #{tpu_custom_call.1} parent=27 // pred_check_branch
          %166 = sbr.rel (%p164) target = $region32
        $region31: #{tpu_custom_call.1} parent=27 // pred_region
          %168 = dma.done %s160, 128
        $region32: #{tpu_custom_call.1} parent=27 // pred_fallthru
          _
        %s169 = sand.u32 %s56, 1
        %s170 = scalar_lea.sflag [#allocation6], %s169
        %s171 = sand.u32 %s56, 1
        %s172 = smul.addr %s171, 8
        %s173 = scalar_lea.vmem [#allocation5], %s172
        // Predicated region
        $region33: #{tpu_custom_call.1} parent=27 // pred_check
          %p174 = pneg %p69
        $region34: #{tpu_custom_call.1} parent=27 // pred_check_branch
          %176 = sbr.rel (%p174) target = $region36
        $region35: #{tpu_custom_call.1} parent=27 // pred_region
          %178 = dma.done %s170, 128
        $region36: #{tpu_custom_call.1} parent=27 // pred_fallthru
          _
        %s179 = sand.u32 %s30, 1
        %s180 = scalar_lea.sflag [#allocation3], %s179
        %s181 = sand.u32 %s30, 1
        %s182 = smul.addr %s181, 8
        %s183 = scalar_lea.vmem [#allocation2], %s182
        %p184 = pneg %p43
        %p185 = pneg %p40
        %s186 = sand.u32 %s56, 1
        %s187 = scalar_lea.sflag [#allocation6], %s186
        %s188 = sand.u32 %s56, 1
        %s189 = smul.addr %s188, 8
        %s190 = scalar_lea.vmem [#allocation5], %s189
        %p191 = pneg %p69
        %p192 = pneg %p66
        %p193 = pneg %p95
        %p194 = pneg %p92
        %s195 = sand.u32 %s82, 1
        %s196 = scalar_lea.sflag [#allocation4], %s195
        %s197 = sand.u32 %s82, 1
        %s198 = smul.addr %s197, 8
        %s199 = scalar_lea.vmem [#allocation7], %s198
        %v200 = vld [vmem:[%s163] sm:$0xff]
        %vm201 = vcmask 326656
        %v202 = vsel %vm201, %v200, -inf
        %203 = vmax.xlane.f32.xlu0 %v202
        %v204 = vpop.xlane.xlu0 %203
        %v205 = vsub.f32 %v200, %v204
        %v206 = vmul.f32 %v205, 1.442695
        %v207 = vpow.pop %v206
        %v208 = vsel %vm201, %v207, 0.0
        %209 = vadd.xlane.f32.xlu0 %v208
        %v210 = vpop.xlane.xlu0 %209
        %v211 = vlog2.pop %v210
        %v212 = vmul.f32 %v211, 0.6931472
        %v213 = vld [vmem:[%s173] sm:$0xff]
        %v214 = vsel %vm201, %v213, 0.0
        %215 = vadd.xlane.f32.xlu0 %v214
        %v216 = vpop.xlane.xlu0 %215
        %v217 = vmul.f32 %v205, %v213
        %v218 = vsel %vm201, %v217, 0.0
        %219 = vadd.xlane.f32.xlu0 %v218
        %v220 = vpop.xlane.xlu0 %219
        %v221 = vsel %vm201, %v205, 0.0
        %222 = vadd.xlane.f32.xlu0 %v221
        %v223 = vpop.xlane.xlu0 %222
        %v224 = vmul.f32 %v212, %v216
        %v225 = vsub.f32 %v224, %v220
        %v226 = vmul.f32 %v225, 0.9
        %v227 = vmul.f32 %v212, 40.0
        %v228 = vsub.f32 %v227, %v223
        %v229 = vmul.f32 %v228, 0.0025
        %v230 = vadd.f32 %v226, %v229
        %v231 = vlaneseq
        %v232 = vshrl.u32 %v231, 7
        %s233 = smul.u32 %s22, 8
        %v234 = vstv %s233
        %v235 = vadd.s32 %v232, %v234
        %vm236 = vcmp.lt.s32.totalorder %v235, 12
        %v237 = vsel %vm236, %v230, 0.0
        %vm238 = vcmask 7168
        %v239 = vsel %vm238, %v237, 0.0
        %240 = vadd.xlane.f32.xlu0 %v239
        %v241 = vpop.xlane.xlu0 %240
        %v242 = vrot.slane %v241, 4
        %v243 = vadd.f32 %v241, %v242
        %v244 = vrot.slane %v243, 2
        %v245 = vadd.f32 %v243, %v244
        %v246 = vrot.slane %v245, 1
        %v247 = vadd.f32 %v245, %v246
        %s248 = vtos %v247
        %v249 = vstv %s248
        %250 = vst [vmem:[%s199] sm:$0xff] %v249
        %s251 = sand.u32 %s82, 1
        %s252 = scalar_lea.sflag [#allocation4], %s251
        %s253 = sand.u32 %s82, 1
        %s254 = smul.addr %s253, 8
        %s255 = scalar_lea.vmem [#allocation7], %s254
        // Predicated region
        $region37: #{tpu_custom_call.1} parent=27 // pred_check
          %p256 = pneg %p92
        $region38: #{tpu_custom_call.1} parent=27 // pred_check_branch
          %258 = sbr.rel (%p256) target = $region40
        $region39: #{tpu_custom_call.1} parent=27 // pred_region
          %260 = vsyncadd %s252, 0
          %s261 = smul.addr %s22, 8
          %s262 = scalar_lea.hbm %s2, %s261
          %s264 = sshll.u32 %s255, 4
          %s265 = int_to_ptr.vmem [resolvable:$true] %s264
          %s266 = sshll.u32 %s262, 4
          %s267 = int_to_ptr.hbm [resolvable:$true] %s266
          %269 = dma.vmem_to_hbm [thread:$0]  %s265, 128, %s267, %s252
        $region40: #{tpu_custom_call.1} parent=27 // pred_fallthru
          _
      $region28: #{tpu_custom_call.1} parent=5 // pred_fallthru
        _
      %p270 = scmp.le.s32.totalorder 2, %s17
      // Predicated region
      $region41: #{tpu_custom_call.1} parent=5 // pred_check
        %p271 = pneg %p270
      $region42: #{tpu_custom_call.1} parent=5 // pred_check_branch
        %273 = sbr.rel (%p271) target = $region44
      $region43: #{tpu_custom_call.1} parent=5 // pred_region
        %s274 = ssub.s32 %s17, 2
        // Predicated region
        $region45: #{tpu_custom_call.1} parent=43 // pred_check
          %p275 = pneg %p98
        $region46: #{tpu_custom_call.1} parent=43 // pred_check_branch
          %277 = sbr.rel (%p275) target = $region48
        $region47: #{tpu_custom_call.1} parent=43 // pred_region
          %s278 = sand.u32 %s83, 1
          %s279 = scalar_lea.sflag [#allocation4], %s278
          %s280 = sand.u32 %s83, 1
          %s281 = smul.addr %s280, 8
          %s282 = scalar_lea.vmem [#allocation7], %s281
          %284 = dma.done %s279, 128
        $region48: #{tpu_custom_call.1} parent=43 // pred_fallthru
          _
      $region44: #{tpu_custom_call.1} parent=5 // pred_fallthru
        _
    $region6: #{tpu_custom_call.1} parent=1 // loop_footer
      %s21 = sadd.s32 1, %s17
    $region7: #{tpu_custom_call.1} parent=1 // loop_footer_branch
      %16 = sbr.rel target = $region3
    $region8: #{tpu_custom_call.1} parent=1 // loop_exit
      _
    %285 = vsyncpa [#allocation3], 1
    %s286 = scalar_lea.sflag [#allocation3], 1
    %287 = vsyncpa %s286, 1
    %288 = vsyncpa [#allocation6], 1
    %s289 = scalar_lea.sflag [#allocation6], 1
    %290 = vsyncpa %s289, 1
    %291 = vsyncpa [#allocation4], 1
    %s292 = scalar_lea.sflag [#allocation4], 1
    %293 = vsyncpa %s292, 1

</llo_original>
